<compile_context>
chip_gen: v6e
topology: v6e:2x2x1
jax: 0.10.0
libtpu: 0.0.40
codegen_flags: <defaults>
</compile_context>

<pallas_src>
import jax
import jax.numpy as jnp
from jax.experimental import pallas as pl
from jax.experimental.pallas import tpu as pltpu

_LANE = 128
_SUBLANE = 8


def _cdiv(a, b):
    return -(-a // b)


def _round_up(v, m):
    return ((v + m - 1) // m) * m


# ----------------------------------------------------------------------------- kernels


def _packed_kernel(x_ref, w_ref, b_ref, o_ref):
    # x_ref: (tb, g*F) VMEM   lane-dense rows, each holding g consecutive samples
    # w_ref: (g*F, g)  VMEM   block-diagonal weight replica (resident across steps)
    # b_ref: (1,)      SMEM   scalar bias
    # o_ref: (tb, g)   VMEM
    acc = jnp.dot(x_ref[...], w_ref[...],
                  preferred_element_type=jnp.float32,
                  precision=jax.lax.Precision.HIGHEST)
    o_ref[...] = (acc + b_ref[0]).astype(o_ref.dtype)


def _rowdot_kernel(x_ref, w_ref, b_ref, o_ref):
    # x_ref: (tb, F) VMEM   streamed batch tile
    # w_ref: (1, F)  VMEM   lane-dense weight (resident across steps)
    # b_ref: (1,)    SMEM   scalar bias
    # o_ref: (tb, 1) VMEM
    x = x_ref[...].astype(jnp.float32)          # cast before mul (bf16-safe)
    w = w_ref[...].astype(jnp.float32)
    acc = jnp.sum(x * w, axis=-1, keepdims=True)  # VPU mul + XLU lane reduce
    o_ref[...] = (acc + b_ref[0]).astype(o_ref.dtype)


# ----------------------------------------------------------------------- tiling helpers


def _vmem_limits():
    try:
        cap = pltpu.get_tpu_info().vmem_capacity_bytes
    except Exception:  # interpret mode / older runtimes
        cap = 64 * 1024 * 1024
    # Scoped limit: ~48 MiB on v7x (64 MiB physical), up to 96 MiB on v5e/v6e (128 MiB).
    vmem_limit = min((cap * 3) // 4, 96 * 1024 * 1024)
    # Leave headroom for compiler scratch / semaphores when sizing our own buffers.
    buffer_budget = (vmem_limit * 3) // 4
    return vmem_limit, buffer_budget


def _choose_rows(num_rows, row_real_bytes, row_in_padded_bytes, row_out_padded_bytes,
                 buffer_budget, n_in_buf=3, n_out_buf=2):
    """Batch-tile rows: big enough to amortize ~0.35us/step overhead against *real*
    streamed bytes, small enough that in+out buffers fit VMEM and (on v7x) both
    TensorCores get at least one tile."""
    if num_rows <= _SUBLANE:
        return num_rows
    # ~8 MiB of real HBM bytes per x buffer sits on the bandwidth-roofline plateau.
    tb = (8 * 1024 * 1024) // max(row_real_bytes, 1)
    # Fit n_in_buf x buffers + n_out_buf (lane-padded) output buffers in the budget.
    per_row = n_in_buf * row_in_padded_bytes + n_out_buf * row_out_padded_bytes
    tb = min(tb, buffer_budget // max(per_row, 1))
    # Keep >= 2 tiles so the "parallel" batch axis can use both v7x TensorCores.
    tb = min(tb, _round_up(_cdiv(num_rows, 2), _SUBLANE))
    return max(_SUBLANE, (tb // _SUBLANE) * _SUBLANE)


# ----------------------------------------------------------------------- forward paths


def _forward_packed(x, weight, bias, g):
    """F < 128 path: pack g samples per lane-dense row, one small MXU matmul per tile."""
    B, F = x.shape
    itemsize = x.dtype.itemsize
    rows = B // g
    cols = g * F                                   # == 128: fully lane-dense rows
    x2 = x.reshape(rows, cols)                     # contiguous reshape: no HBM copy
    # Block-diagonal weight replica: w_bd[j*F + f, j] = weight[0, f].
    w_bd = jnp.kron(jnp.eye(g, dtype=weight.dtype), weight[0][:, None])

    vmem_limit, budget = _vmem_limits()
    tb = _choose_rows(rows,
                      row_real_bytes=cols * itemsize,
                      row_in_padded_bytes=_round_up(cols, _LANE) * itemsize,
                      row_out_padded_bytes=_LANE * itemsize,
                      buffer_budget=budget)
    num_tiles = _cdiv(rows, tb)

    if num_tiles > 2:  # deepen DMA pipeline only when the grid is long enough to use it
        x_spec = pl.BlockSpec((tb, cols), lambda i: (i, 0),
                              pipeline_mode=pl.Buffered(3))
    else:
        x_spec = pl.BlockSpec((tb, cols), lambda i: (i, 0))

    out = pl.pallas_call(
        _packed_kernel,
        out_shape=jax.ShapeDtypeStruct((rows, g), x.dtype),
        grid=(num_tiles,),
        in_specs=[
            x_spec,                                             # x: streamed tiles
            pl.BlockSpec((cols, g), lambda i: (0, 0)),          # w_bd: VMEM-resident
            pl.BlockSpec(memory_space=pltpu.MemorySpace.SMEM),  # bias: scalar in SMEM
        ],
        out_specs=pl.BlockSpec((tb, g), lambda i: (i, 0)),
        compiler_params=pltpu.CompilerParams(
            dimension_semantics=("parallel",),  # shard batch tiles across TCs (v7x)
            vmem_limit_bytes=vmem_limit,
        ),
        cost_estimate=pl.CostEstimate(
            flops=2 * B * F,
            bytes_accessed=itemsize * (B * F + cols * g + B + 1),
            transcendentals=0,
        ),
    )(x2, w_bd, bias)
    return out.reshape(B, 1)                       # contiguous reshape: no HBM copy


def _forward_general(x, weight, bias):
    """General path (F >= 128, or shapes that do not repack cleanly)."""
    B, F = x.shape
    itemsize = x.dtype.itemsize

    vmem_limit, budget = _vmem_limits()
    tb = _choose_rows(B,
                      row_real_bytes=F * itemsize,
                      row_in_padded_bytes=_round_up(F, _LANE) * itemsize,
                      row_out_padded_bytes=_LANE * itemsize,  # (tb,1) pads 128x in VMEM
                      buffer_budget=budget)
    num_tiles = _cdiv(B, tb)

    if num_tiles > 2:
        x_spec = pl.BlockSpec((tb, F), lambda i: (i, 0), pipeline_mode=pl.Buffered(3))
    else:
        x_spec = pl.BlockSpec((tb, F), lambda i: (i, 0))

    # TODO(synk): for F >= 128 the (tb, 1) output tile is still 128x lane-padded in
    # VMEM; emitting a transposed (1, tb) tile would make the writeback lane-dense.
    out = pl.pallas_call(
        _rowdot_kernel,
        out_shape=jax.ShapeDtypeStruct((B, 1), x.dtype),  # no pad: edge block is masked
        grid=(num_tiles,),
        in_specs=[
            x_spec,
            pl.BlockSpec((1, F), lambda i: (0, 0)),             # weight: VMEM-resident
            pl.BlockSpec(memory_space=pltpu.MemorySpace.SMEM),  # bias: scalar in SMEM
        ],
        out_specs=pl.BlockSpec((tb, 1), lambda i: (i, 0)),
        compiler_params=pltpu.CompilerParams(
            dimension_semantics=("parallel",),
            vmem_limit_bytes=vmem_limit,
        ),
        cost_estimate=pl.CostEstimate(
            flops=2 * B * F,
            bytes_accessed=itemsize * (B * F + F + B + 1),
            transcendentals=0,
        ),
    )(x, weight, bias)
    return out


def linear_forward(x, weight, bias):
    """y = x @ weight.T + bias, matching torch.nn.Linear(num_feature, 1).

    x: (B, F); weight: (1, F) (PyTorch layout); bias: (1,). Returns (B, 1).
    """
    B, F = x.shape
    assert weight.shape == (1, F) and bias.shape == (1,)
    if F < _LANE and _LANE % F == 0:
        g = _LANE // F
        if B > 0 and B % g == 0:
            return _forward_packed(x, weight, bias, g)
    return _forward_general(x, weight, bias)


if __name__ == "__main__":
    key = jax.random.PRNGKey(0)
    kx, kw, kb = jax.random.split(key, 3)

    batch, num_feature = 8, 32   # small demo shape -> packed path (g = 4)

    # Deterministic synthetic parameters (same shapes as nn.Linear(num_feature, 1)).
    bound = 1.0 / jnp.sqrt(num_feature)
    x = jax.random.normal(kx, (batch, num_feature), dtype=jnp.float32)
    weight = jax.random.uniform(kw, (1, num_feature), minval=-bound, maxval=bound,
                                dtype=jnp.float32)
    bias = jax.random.uniform(kb, (1,), minval=-bound, maxval=bound,
                              dtype=jnp.float32)

    y = linear_forward(x, weight, bias)
    jax.block_until_ready(y)

    # Cross-check against plain JAX reference (tolerance covers MXU f32 matmul passes).
    y_ref = x @ weight.T + bias
    assert y.shape == (batch, 1)
    assert jnp.allclose(y, y_ref, atol=5e-3, rtol=5e-3), float(jnp.abs(y - y_ref).max())

    print("KERNEL_OK")
</pallas_src>

<mosaic_0001>
module attributes {stable_mosaic.version = 11 : i64} {
  func.func @_packed_kernel(%arg0: i32, %arg1: memref<2x128xf32, #tpu.memory_space<vmem>>, %arg2: memref<128x4xf32, #tpu.memory_space<vmem>>, %arg3: memref<1xf32, #tpu.memory_space<smem>>, %arg4: memref<2x4xf32, #tpu.memory_space<vmem>>) attributes {dimension_semantics = [#tpu.dimension_semantics<parallel>], iteration_bounds = array<i64: 1>, scalar_prefetch = 0 : i64, scratch_operands = 0 : i64, tpu.core_type = #tpu.core_type<tc>, window_params = [{transform_indices = @transform_0, window_bounds = array<i64: 2, 128>}, {pipeline_mode = #tpu.pipeline_mode<synchronous>, transform_indices = @transform_1, window_bounds = array<i64: 128, 4>}, {transform_indices = @transform_2, window_bounds = array<i64: 1>}, {transform_indices = @transform_3, window_bounds = array<i64: 2, 4>}]} {
    %c0 = arith.constant 0 : index
    %c0_0 = arith.constant 0 : index
    %0 = vector.load %arg1[%c0, %c0_0] : memref<2x128xf32, #tpu.memory_space<vmem>>, vector<2x128xf32>
    %c0_1 = arith.constant 0 : index
    %c0_2 = arith.constant 0 : index
    %1 = vector.load %arg2[%c0_1, %c0_2] : memref<128x4xf32, #tpu.memory_space<vmem>>, vector<128x4xf32>
    %cst = arith.constant dense<0.000000e+00> : vector<2x4xf32>
    %2 = tpu.matmul %0, %1, %cst {dimension_numbers = #tpu.dot_dimension_numbers<[1], [0], [0], [1], [0, 0, 1, 1], [], []>, precision = #tpu.contract_precision<fp32>} : vector<2x128xf32>, vector<128x4xf32>, vector<2x4xf32> -> vector<2x4xf32>
    %c0_3 = arith.constant 0 : index
    %3 = memref.load %arg3[%c0_3] : memref<1xf32, #tpu.memory_space<smem>>
    %4 = vector.broadcast %3 : f32 to vector<2x4xf32>
    %5 = arith.addf %2, %4 : vector<2x4xf32>
    %c0_4 = arith.constant 0 : index
    %c0_5 = arith.constant 0 : index
    %6 = vector.load %arg4[%c0_4, %c0_5] : memref<2x4xf32, #tpu.memory_space<vmem>>, vector<2x4xf32>
    tpu.vector_store %arg4[%c0_4, %c0_5], %5 {strides = array<i32>} : memref<2x4xf32, #tpu.memory_space<vmem>>, vector<2x4xf32>,
    return
  }
  func.func @transform_0(%arg0: i32) -> (i32, i32) {
    %c0_i32 = arith.constant 0 : i32
    %c0_i32_0 = arith.constant 0 : i32
    return %arg0, %c0_i32 : i32, i32
  }
  func.func @transform_1(%arg0: i32) -> (i32, i32) {
    %c0_i32 = arith.constant 0 : i32
    %c0_i32_0 = arith.constant 0 : i32
    %c0_i32_1 = arith.constant 0 : i32
    return %c0_i32, %c0_i32_0 : i32, i32
  }
  func.func @transform_2(%arg0: i32) -> i32 {
    %c0_i32 = arith.constant 0 : i32
    %c0_i32_0 = arith.constant 0 : i32
    return %c0_i32 : i32
  }
  func.func @transform_3(%arg0: i32) -> (i32, i32) {
    %c0_i32 = arith.constant 0 : i32
    %c0_i32_0 = arith.constant 0 : i32
    return %arg0, %c0_i32 : i32, i32
  }
}

</mosaic_0001>

<llo_original>
// kernel: tpu_custom_call.1
$region0: #{tpu_custom_call.1}
  #allocation0 [shape = 'u32[]', space=smem, size = 0x4, offset = 0x4, fixed_abs, tag = 'smem constant byte address 0x4 - core index']
  #allocation1 [shape = 'u32[144,128]{1,0:T(1,128)}', space=vmem, size = 0x12000, scoped, tag = 'internal scratch']
  #allocation2 [shape = 'f32[1]{0:T(128)S(6)}', space=smem, size = 0x200, scoped, tag = 'scoped memory for tpu_custom_call.1']
  %s0 = inlined_call_operand.vmem [shape: f32[2,128], index: 0, kind: input, shape index: {}]
  %s1 = inlined_call_operand.vmem [shape: f32[128,4], index: 1, kind: input, shape index: {}]
  %s2 = inlined_call_operand.<no memory space> [shape: f32[1], index: 2, kind: input, shape index: {}]
  %s3 = inlined_call_operand.hbm [shape: f32[2,4], index: 3, kind: output, shape index: {}]
  %s4 = sld [smem:[#allocation0]]
  $region22: #{tpu_custom_call.1} parent=0
    _
  %s6 = ssub.s32 1, %s4
  %s7 = scalar_select 0, %s6, %s4
  %8 = sst [smem:[#allocation2]] %s2
  $region1: #{tpu_custom_call.1} parent=0
    #allocation3 [shape = 'u8[1024]{0}', space=vmem, size = 0x400, scoped, tag = 'output window, operand 0, single buffered']
    #allocation4 [shape = 's32[1]{0}', space=sflag, size = 0x4, scoped, tag = 'scoped memory for tpu_custom_call.1']
    %9 = vsyncpa [#allocation4], 0
    // Predicated region
    $region2: #{tpu_custom_call.1} parent=1 // pred_check
      _
    $region3: #{tpu_custom_call.1} parent=1 // pred_check_branch
      %11 = sbr.rel (0) target = $region5
    $region4: #{tpu_custom_call.1} parent=1 // pred_region
      _
    $region5: #{tpu_custom_call.1} parent=1 // pred_fallthru
      _
    // Predicated region
    $region6: #{tpu_custom_call.1} parent=1 // pred_check
      _
    $region7: #{tpu_custom_call.1} parent=1 // pred_check_branch
      %13 = sbr.rel (0) target = $region9
    $region8: #{tpu_custom_call.1} parent=1 // pred_region
      _
    $region9: #{tpu_custom_call.1} parent=1 // pred_fallthru
      _
    // Predicated region
    $region10: #{tpu_custom_call.1} parent=1 // pred_check
      _
    $region11: #{tpu_custom_call.1} parent=1 // pred_check_branch
      %15 = sbr.rel (0) target = $region13
    $region12: #{tpu_custom_call.1} parent=1 // pred_region
      _
    $region13: #{tpu_custom_call.1} parent=1 // pred_fallthru
      _
    %v16 = vld [vmem:[%s0] sm:$0x3]
    %v17 = vld [vmem:[%s1] sm:$0xff]
    %v18 = vld [vmem:[%s1 + $0x8] sm:$0xff]
    %v19 = vld [vmem:[%s1 + $0x10] sm:$0xff]
    %v20 = vld [vmem:[%s1 + $0x18] sm:$0xff]
    %v21 = vld [vmem:[%s1 + $0x20] sm:$0xff]
    %v22 = vld [vmem:[%s1 + $0x28] sm:$0xff]
    %v23 = vld [vmem:[%s1 + $0x30] sm:$0xff]
    %v24 = vld [vmem:[%s1 + $0x38] sm:$0xff]
    %v25 = vld [vmem:[%s1 + $0x40] sm:$0xff]
    %v26 = vld [vmem:[%s1 + $0x48] sm:$0xff]
    %v27 = vld [vmem:[%s1 + $0x50] sm:$0xff]
    %v28 = vld [vmem:[%s1 + $0x58] sm:$0xff]
    %v29 = vld [vmem:[%s1 + $0x60] sm:$0xff]
    %v30 = vld [vmem:[%s1 + $0x68] sm:$0xff]
    %v31 = vld [vmem:[%s1 + $0x70] sm:$0xff]
    %v32 = vld [vmem:[%s1 + $0x78] sm:$0xff]
    %s33 = sld [smem:[#allocation2]]
    %v34 = vstv %s33
    %35 = vmatprep.subr.mxu0 0.0
    %v36 = vand.u32 %v32, 4294901760
    %37 = vmatpush1.msra.mxu0 %v36
    %38 = vmatprep.subr.mxu0 0.0
    %v39 = vand.u32 %v31, 4294901760
    %40 = vmatpush1.msra.mxu0 %v39
    %41 = vmatprep.subr.mxu0 0.0
    %v42 = vand.u32 %v30, 4294901760
    %43 = vmatpush1.msra.mxu0 %v42
    %44 = vmatprep.subr.mxu0 0.0
    %v45 = vand.u32 %v29, 4294901760
    %46 = vmatpush1.msra.mxu0 %v45
    %47 = vmatprep.subr.mxu0 0.0
    %v48 = vand.u32 %v28, 4294901760
    %49 = vmatpush1.msra.mxu0 %v48
    %50 = vmatprep.subr.mxu0 0.0
    %v51 = vand.u32 %v27, 4294901760
    %52 = vmatpush1.msra.mxu0 %v51
    %53 = vmatprep.subr.mxu0 0.0
    %v54 = vand.u32 %v26, 4294901760
    %55 = vmatpush1.msra.mxu0 %v54
    %56 = vmatprep.subr.mxu0 0.0
    %v57 = vand.u32 %v25, 4294901760
    %58 = vmatpush1.msra.mxu0 %v57
    %59 = vmatprep.subr.mxu0 0.0
    %v60 = vand.u32 %v24, 4294901760
    %61 = vmatpush1.msra.mxu0 %v60
    %62 = vmatprep.subr.mxu0 0.0
    %v63 = vand.u32 %v23, 4294901760
    %64 = vmatpush1.msra.mxu0 %v63
    %65 = vmatprep.subr.mxu0 0.0
    %v66 = vand.u32 %v22, 4294901760
    %67 = vmatpush1.msra.mxu0 %v66
    %68 = vmatprep.subr.mxu0 0.0
    %v69 = vand.u32 %v21, 4294901760
    %70 = vmatpush1.msra.mxu0 %v69
    %71 = vmatprep.subr.mxu0 0.0
    %v72 = vand.u32 %v20, 4294901760
    %73 = vmatpush1.msra.mxu0 %v72
    %74 = vmatprep.subr.mxu0 0.0
    %v75 = vand.u32 %v19, 4294901760
    %76 = vmatpush1.msra.mxu0 %v75
    %77 = vmatprep.subr.mxu0 0.0
    %v78 = vand.u32 %v18, 4294901760
    %79 = vmatpush1.msra.mxu0 %v78
    %80 = vmatprep.subr.mxu0 0.0
    %v81 = vand.u32 %v17, 4294901760
    %82 = vmatpush1.msra.mxu0 %v81
    %83 = vmatprep.subr.mxu0 0.0
    %84 = vmatpush2.msra.mxu0 0.0
    %85 = vmatprep.subr.mxu0 0.0
    %86 = vmatpush2.msra.mxu0 0.0
    %87 = vmatprep.subr.mxu0 0.0
    %88 = vmatpush2.msra.mxu0 0.0
    %89 = vmatprep.subr.mxu0 0.0
    %90 = vmatpush2.msra.mxu0 0.0
    %91 = vmatprep.subr.mxu0 0.0
    %92 = vmatpush2.msra.mxu0 0.0
    %93 = vmatprep.subr.mxu0 0.0
    %94 = vmatpush2.msra.mxu0 0.0
    %95 = vmatprep.subr.mxu0 0.0
    %96 = vmatpush2.msra.mxu0 0.0
    %97 = vmatprep.subr.mxu0 0.0
    %98 = vmatpush2.msra.mxu0 0.0
    %99 = vmatprep.subr.mxu0 0.0
    %100 = vmatpush2.msra.mxu0 0.0
    %101 = vmatprep.subr.mxu0 0.0
    %102 = vmatpush2.msra.mxu0 0.0
    %103 = vmatprep.subr.mxu0 0.0
    %104 = vmatpush2.msra.mxu0 0.0
    %105 = vmatprep.subr.mxu0 0.0
    %106 = vmatpush2.msra.mxu0 0.0
    %107 = vmatprep.subr.mxu0 0.0
    %108 = vmatpush2.msra.mxu0 0.0
    %109 = vmatprep.subr.mxu0 0.0
    %110 = vmatpush2.msra.mxu0 0.0
    %111 = vmatprep.subr.mxu0 0.0
    %112 = vmatpush2.msra.mxu0 0.0
    %113 = vmatprep.subr.mxu0 0.0
    %114 = vmatpush2.msra.mxu0 0.0
    %115 = vmatprep.mubr.f32.mxu0 0.0
    %v116 = vand.u32 %v16, 4294901760
    %v117 = vsub.f32 %v16, %v116
    %v118 = vand.u32 %v117, 4294901760
    %v119 = vsub.f32 %v117, %v118
    %v120 = vand.u32 %v119, 4294901760
    %121 = vmatmul.mubr.f32.gmra.mxu0 %v120
    %v122 = vpop.f32.mrf.mxu0
    %v123 = vadd.f32 %v34, %v122
    %v124 = vpop.f32.mrf.mxu0
    %125 = vdwg.mxu0
    %126 = vmatprep.subr.mxu0 0.0
    %v127 = vand.u32 %v32, 4294901760
    %v128 = vsub.f32 %v32, %v127
    %v129 = vand.u32 %v128, 4294901760
    %v130 = vsub.f32 %v128, %v129
    %v131 = vand.u32 %v130, 4294901760
    %132 = vmatpush1.msra.mxu0 %v131
    %133 = vmatprep.subr.mxu0 0.0
    %v134 = vand.u32 %v31, 4294901760
    %v135 = vsub.f32 %v31, %v134
    %v136 = vand.u32 %v135, 4294901760
    %v137 = vsub.f32 %v135, %v136
    %v138 = vand.u32 %v137, 4294901760
    %139 = vmatpush1.msra.mxu0 %v138
    %140 = vmatprep.subr.mxu0 0.0
    %v141 = vand.u32 %v30, 4294901760
    %v142 = vsub.f32 %v30, %v141
    %v143 = vand.u32 %v142, 4294901760
    %v144 = vsub.f32 %v142, %v143
    %v145 = vand.u32 %v144, 4294901760
    %146 = vmatpush1.msra.mxu0 %v145
    %147 = vmatprep.subr.mxu0 0.0
    %v148 = vand.u32 %v29, 4294901760
    %v149 = vsub.f32 %v29, %v148
    %v150 = vand.u32 %v149, 4294901760
    %v151 = vsub.f32 %v149, %v150
    %v152 = vand.u32 %v151, 4294901760
    %153 = vmatpush1.msra.mxu0 %v152
    %154 = vmatprep.subr.mxu0 0.0
    %v155 = vand.u32 %v28, 4294901760
    %v156 = vsub.f32 %v28, %v155
    %v157 = vand.u32 %v156, 4294901760
    %v158 = vsub.f32 %v156, %v157
    %v159 = vand.u32 %v158, 4294901760
    %160 = vmatpush1.msra.mxu0 %v159
    %161 = vmatprep.subr.mxu0 0.0
    %v162 = vand.u32 %v27, 4294901760
    %v163 = vsub.f32 %v27, %v162
    %v164 = vand.u32 %v163, 4294901760
    %v165 = vsub.f32 %v163, %v164
    %v166 = vand.u32 %v165, 4294901760
    %167 = vmatpush1.msra.mxu0 %v166
    %168 = vmatprep.subr.mxu0 0.0
    %v169 = vand.u32 %v26, 4294901760
    %v170 = vsub.f32 %v26, %v169
    %v171 = vand.u32 %v170, 4294901760
    %v172 = vsub.f32 %v170, %v171
    %v173 = vand.u32 %v172, 4294901760
    %174 = vmatpush1.msra.mxu0 %v173
    %175 = vmatprep.subr.mxu0 0.0
    %v176 = vand.u32 %v25, 4294901760
    %v177 = vsub.f32 %v25, %v176
    %v178 = vand.u32 %v177, 4294901760
    %v179 = vsub.f32 %v177, %v178
    %v180 = vand.u32 %v179, 4294901760
    %181 = vmatpush1.msra.mxu0 %v180
    %182 = vmatprep.subr.mxu0 0.0
    %v183 = vand.u32 %v24, 4294901760
    %v184 = vsub.f32 %v24, %v183
    %v185 = vand.u32 %v184, 4294901760
    %v186 = vsub.f32 %v184, %v185
    %v187 = vand.u32 %v186, 4294901760
    %188 = vmatpush1.msra.mxu0 %v187
    %189 = vmatprep.subr.mxu0 0.0
    %v190 = vand.u32 %v23, 4294901760
    %v191 = vsub.f32 %v23, %v190
    %v192 = vand.u32 %v191, 4294901760
    %v193 = vsub.f32 %v191, %v192
    %v194 = vand.u32 %v193, 4294901760
    %195 = vmatpush1.msra.mxu0 %v194
    %196 = vmatprep.subr.mxu0 0.0
    %v197 = vand.u32 %v22, 4294901760
    %v198 = vsub.f32 %v22, %v197
    %v199 = vand.u32 %v198, 4294901760
    %v200 = vsub.f32 %v198, %v199
    %v201 = vand.u32 %v200, 4294901760
    %202 = vmatpush1.msra.mxu0 %v201
    %203 = vmatprep.subr.mxu0 0.0
    %v204 = vand.u32 %v21, 4294901760
    %v205 = vsub.f32 %v21, %v204
    %v206 = vand.u32 %v205, 4294901760
    %v207 = vsub.f32 %v205, %v206
    %v208 = vand.u32 %v207, 4294901760
    %209 = vmatpush1.msra.mxu0 %v208
    %210 = vmatprep.subr.mxu0 0.0
    %v211 = vand.u32 %v20, 4294901760
    %v212 = vsub.f32 %v20, %v211
    %v213 = vand.u32 %v212, 4294901760
    %v214 = vsub.f32 %v212, %v213
    %v215 = vand.u32 %v214, 4294901760
    %216 = vmatpush1.msra.mxu0 %v215
    %217 = vmatprep.subr.mxu0 0.0
    %v218 = vand.u32 %v19, 4294901760
    %v219 = vsub.f32 %v19, %v218
    %v220 = vand.u32 %v219, 4294901760
    %v221 = vsub.f32 %v219, %v220
    %v222 = vand.u32 %v221, 4294901760
    %223 = vmatpush1.msra.mxu0 %v222
    %224 = vmatprep.subr.mxu0 0.0
    %v225 = vand.u32 %v18, 4294901760
    %v226 = vsub.f32 %v18, %v225
    %v227 = vand.u32 %v226, 4294901760
    %v228 = vsub.f32 %v226, %v227
    %v229 = vand.u32 %v228, 4294901760
    %230 = vmatpush1.msra.mxu0 %v229
    %231 = vmatprep.subr.mxu0 0.0
    %v232 = vand.u32 %v17, 4294901760
    %v233 = vsub.f32 %v17, %v232
    %v234 = vand.u32 %v233, 4294901760
    %v235 = vsub.f32 %v233, %v234
    %v236 = vand.u32 %v235, 4294901760
    %237 = vmatpush1.msra.mxu0 %v236
    %238 = vmatprep.subr.mxu0 0.0
    %239 = vmatpush2.msra.mxu0 0.0
    %240 = vmatprep.subr.mxu0 0.0
    %241 = vmatpush2.msra.mxu0 0.0
    %242 = vmatprep.subr.mxu0 0.0
    %243 = vmatpush2.msra.mxu0 0.0
    %244 = vmatprep.subr.mxu0 0.0
    %245 = vmatpush2.msra.mxu0 0.0
    %246 = vmatprep.subr.mxu0 0.0
    %247 = vmatpush2.msra.mxu0 0.0
    %248 = vmatprep.subr.mxu0 0.0
    %249 = vmatpush2.msra.mxu0 0.0
    %250 = vmatprep.subr.mxu0 0.0
    %251 = vmatpush2.msra.mxu0 0.0
    %252 = vmatprep.subr.mxu0 0.0
    %253 = vmatpush2.msra.mxu0 0.0
    %254 = vmatprep.subr.mxu0 0.0
    %255 = vmatpush2.msra.mxu0 0.0
    %256 = vmatprep.subr.mxu0 0.0
    %257 = vmatpush2.msra.mxu0 0.0
    %258 = vmatprep.subr.mxu0 0.0
    %259 = vmatpush2.msra.mxu0 0.0
    %260 = vmatprep.subr.mxu0 0.0
    %261 = vmatpush2.msra.mxu0 0.0
    %262 = vmatprep.subr.mxu0 0.0
    %263 = vmatpush2.msra.mxu0 0.0
    %264 = vmatprep.subr.mxu0 0.0
    %265 = vmatpush2.msra.mxu0 0.0
    %266 = vmatprep.subr.mxu0 0.0
    %267 = vmatpush2.msra.mxu0 0.0
    %268 = vmatprep.subr.mxu0 0.0
    %269 = vmatpush2.msra.mxu0 0.0
    %270 = vmatprep.mubr.f32.mxu0 0.0
    %v271 = vand.u32 %v16, 4294901760
    %272 = vmatmul.mubr.f32.gmra.mxu0 %v271
    %v273 = vpop.f32.mrf.mxu0
    %v274 = vadd.f32 %v123, %v273
    %v275 = vpop.f32.mrf.mxu0
    %276 = vdwg.mxu0
    %277 = vmatprep.subr.mxu0 0.0
    %v278 = vand.u32 %v32, 4294901760
    %v279 = vsub.f32 %v32, %v278
    %280 = vmatpush1.msra.mxu0 %v279
    %281 = vmatprep.subr.mxu0 0.0
    %v282 = vand.u32 %v31, 4294901760
    %v283 = vsub.f32 %v31, %v282
    %284 = vmatpush1.msra.mxu0 %v283
    %285 = vmatprep.subr.mxu0 0.0
    %v286 = vand.u32 %v30, 4294901760
    %v287 = vsub.f32 %v30, %v286
    %288 = vmatpush1.msra.mxu0 %v287
    %289 = vmatprep.subr.mxu0 0.0
    %v290 = vand.u32 %v29, 4294901760
    %v291 = vsub.f32 %v29, %v290
    %292 = vmatpush1.msra.mxu0 %v291
    %293 = vmatprep.subr.mxu0 0.0
    %v294 = vand.u32 %v28, 4294901760
    %v295 = vsub.f32 %v28, %v294
    %296 = vmatpush1.msra.mxu0 %v295
    %297 = vmatprep.subr.mxu0 0.0
    %v298 = vand.u32 %v27, 4294901760
    %v299 = vsub.f32 %v27, %v298
    %300 = vmatpush1.msra.mxu0 %v299
    %301 = vmatprep.subr.mxu0 0.0
    %v302 = vand.u32 %v26, 4294901760
    %v303 = vsub.f32 %v26, %v302
    %304 = vmatpush1.msra.mxu0 %v303
    %305 = vmatprep.subr.mxu0 0.0
    %v306 = vand.u32 %v25, 4294901760
    %v307 = vsub.f32 %v25, %v306
    %308 = vmatpush1.msra.mxu0 %v307
    %309 = vmatprep.subr.mxu0 0.0
    %v310 = vand.u32 %v24, 4294901760
    %v311 = vsub.f32 %v24, %v310
    %312 = vmatpush1.msra.mxu0 %v311
    %313 = vmatprep.subr.mxu0 0.0
    %v314 = vand.u32 %v23, 4294901760
    %v315 = vsub.f32 %v23, %v314
    %316 = vmatpush1.msra.mxu0 %v315
    %317 = vmatprep.subr.mxu0 0.0
    %v318 = vand.u32 %v22, 4294901760
    %v319 = vsub.f32 %v22, %v318
    %320 = vmatpush1.msra.mxu0 %v319
    %321 = vmatprep.subr.mxu0 0.0
    %v322 = vand.u32 %v21, 4294901760
    %v323 = vsub.f32 %v21, %v322
    %324 = vmatpush1.msra.mxu0 %v323
    %325 = vmatprep.subr.mxu0 0.0
    %v326 = vand.u32 %v20, 4294901760
    %v327 = vsub.f32 %v20, %v326
    %328 = vmatpush1.msra.mxu0 %v327
    %329 = vmatprep.subr.mxu0 0.0
    %v330 = vand.u32 %v19, 4294901760
    %v331 = vsub.f32 %v19, %v330
    %332 = vmatpush1.msra.mxu0 %v331
    %333 = vmatprep.subr.mxu0 0.0
    %v334 = vand.u32 %v18, 4294901760
    %v335 = vsub.f32 %v18, %v334
    %336 = vmatpush1.msra.mxu0 %v335
    %337 = vmatprep.subr.mxu0 0.0
    %v338 = vand.u32 %v17, 4294901760
    %v339 = vsub.f32 %v17, %v338
    %340 = vmatpush1.msra.mxu0 %v339
    %341 = vmatprep.subr.mxu0 0.0
    %342 = vmatpush2.msra.mxu0 0.0
    %343 = vmatprep.subr.mxu0 0.0
    %344 = vmatpush2.msra.mxu0 0.0
    %345 = vmatprep.subr.mxu0 0.0
    %346 = vmatpush2.msra.mxu0 0.0
    %347 = vmatprep.subr.mxu0 0.0
    %348 = vmatpush2.msra.mxu0 0.0
    %349 = vmatprep.subr.mxu0 0.0
    %350 = vmatpush2.msra.mxu0 0.0
    %351 = vmatprep.subr.mxu0 0.0
    %352 = vmatpush2.msra.mxu0 0.0
    %353 = vmatprep.subr.mxu0 0.0
    %354 = vmatpush2.msra.mxu0 0.0
    %355 = vmatprep.subr.mxu0 0.0
    %356 = vmatpush2.msra.mxu0 0.0
    %357 = vmatprep.subr.mxu0 0.0
    %358 = vmatpush2.msra.mxu0 0.0
    %359 = vmatprep.subr.mxu0 0.0
    %360 = vmatpush2.msra.mxu0 0.0
    %361 = vmatprep.subr.mxu0 0.0
    %362 = vmatpush2.msra.mxu0 0.0
    %363 = vmatprep.subr.mxu0 0.0
    %364 = vmatpush2.msra.mxu0 0.0
    %365 = vmatprep.subr.mxu0 0.0
    %366 = vmatpush2.msra.mxu0 0.0
    %367 = vmatprep.subr.mxu0 0.0
    %368 = vmatpush2.msra.mxu0 0.0
    %369 = vmatprep.subr.mxu0 0.0
    %370 = vmatpush2.msra.mxu0 0.0
    %371 = vmatprep.subr.mxu0 0.0
    %372 = vmatpush2.msra.mxu0 0.0
    %373 = vmatprep.mubr.f32.mxu0 0.0
    %v374 = vand.u32 %v16, 4294901760
    %v375 = vsub.f32 %v16, %v374
    %376 = vmatmul.mubr.f32.gmra.mxu0 %v375
    %v377 = vpop.f32.mrf.mxu0
    %v378 = vadd.f32 %v274, %v377
    %v379 = vpop.f32.mrf.mxu0
    %380 = vdwg.mxu0
    %381 = vmatprep.subr.mxu0 0.0
    %v382 = vand.u32 %v32, 4294901760
    %383 = vmatpush1.msra.mxu0 %v382
    %384 = vmatprep.subr.mxu0 0.0
    %v385 = vand.u32 %v31, 4294901760
    %386 = vmatpush1.msra.mxu0 %v385
    %387 = vmatprep.subr.mxu0 0.0
    %v388 = vand.u32 %v30, 4294901760
    %389 = vmatpush1.msra.mxu0 %v388
    %390 = vmatprep.subr.mxu0 0.0
    %v391 = vand.u32 %v29, 4294901760
    %392 = vmatpush1.msra.mxu0 %v391
    %393 = vmatprep.subr.mxu0 0.0
    %v394 = vand.u32 %v28, 4294901760
    %395 = vmatpush1.msra.mxu0 %v394
    %396 = vmatprep.subr.mxu0 0.0
    %v397 = vand.u32 %v27, 4294901760
    %398 = vmatpush1.msra.mxu0 %v397
    %399 = vmatprep.subr.mxu0 0.0
    %v400 = vand.u32 %v26, 4294901760
    %401 = vmatpush1.msra.mxu0 %v400
    %402 = vmatprep.subr.mxu0 0.0
    %v403 = vand.u32 %v25, 4294901760
    %404 = vmatpush1.msra.mxu0 %v403
    %405 = vmatprep.subr.mxu0 0.0
    %v406 = vand.u32 %v24, 4294901760
    %407 = vmatpush1.msra.mxu0 %v406
    %408 = vmatprep.subr.mxu0 0.0
    %v409 = vand.u32 %v23, 4294901760
    %410 = vmatpush1.msra.mxu0 %v409
    %411 = vmatprep.subr.mxu0 0.0
    %v412 = vand.u32 %v22, 4294901760
    %413 = vmatpush1.msra.mxu0 %v412
    %414 = vmatprep.subr.mxu0 0.0
    %v415 = vand.u32 %v21, 4294901760
    %416 = vmatpush1.msra.mxu0 %v415
    %417 = vmatprep.subr.mxu0 0.0
    %v418 = vand.u32 %v20, 4294901760
    %419 = vmatpush1.msra.mxu0 %v418
    %420 = vmatprep.subr.mxu0 0.0
    %v421 = vand.u32 %v19, 4294901760
    %422 = vmatpush1.msra.mxu0 %v421
    %423 = vmatprep.subr.mxu0 0.0
    %v424 = vand.u32 %v18, 4294901760
    %425 = vmatpush1.msra.mxu0 %v424
    %426 = vmatprep.subr.mxu0 0.0
    %v427 = vand.u32 %v17, 4294901760
    %428 = vmatpush1.msra.mxu0 %v427
    %429 = vmatprep.subr.mxu0 0.0
    %430 = vmatpush2.msra.mxu0 0.0
    %431 = vmatprep.subr.mxu0 0.0
    %432 = vmatpush2.msra.mxu0 0.0
    %433 = vmatprep.subr.mxu0 0.0
    %434 = vmatpush2.msra.mxu0 0.0
    %435 = vmatprep.subr.mxu0 0.0
    %436 = vmatpush2.msra.mxu0 0.0
    %437 = vmatprep.subr.mxu0 0.0
    %438 = vmatpush2.msra.mxu0 0.0
    %439 = vmatprep.subr.mxu0 0.0
    %440 = vmatpush2.msra.mxu0 0.0
    %441 = vmatprep.subr.mxu0 0.0
    %442 = vmatpush2.msra.mxu0 0.0
    %443 = vmatprep.subr.mxu0 0.0
    %444 = vmatpush2.msra.mxu0 0.0
    %445 = vmatprep.subr.mxu0 0.0
    %446 = vmatpush2.msra.mxu0 0.0
    %447 = vmatprep.subr.mxu0 0.0
    %448 = vmatpush2.msra.mxu0 0.0
    %449 = vmatprep.subr.mxu0 0.0
    %450 = vmatpush2.msra.mxu0 0.0
    %451 = vmatprep.subr.mxu0 0.0
    %452 = vmatpush2.msra.mxu0 0.0
    %453 = vmatprep.subr.mxu0 0.0
    %454 = vmatpush2.msra.mxu0 0.0
    %455 = vmatprep.subr.mxu0 0.0
    %456 = vmatpush2.msra.mxu0 0.0
    %457 = vmatprep.subr.mxu0 0.0
    %458 = vmatpush2.msra.mxu0 0.0
    %459 = vmatprep.subr.mxu0 0.0
    %460 = vmatpush2.msra.mxu0 0.0
    %461 = vmatprep.mubr.f32.mxu0 0.0
    %v462 = vand.u32 %v16, 4294901760
    %v463 = vsub.f32 %v16, %v462
    %v464 = vand.u32 %v463, 4294901760
    %465 = vmatmul.mubr.f32.gmra.mxu0 %v464
    %v466 = vpop.f32.mrf.mxu0
    %v467 = vadd.f32 %v378, %v466
    %v468 = vpop.f32.mrf.mxu0
    %469 = vdwg.mxu0
    %470 = vmatprep.subr.mxu0 0.0
    %v471 = vand.u32 %v32, 4294901760
    %v472 = vsub.f32 %v32, %v471
    %v473 = vand.u32 %v472, 4294901760
    %474 = vmatpush1.msra.mxu0 %v473
    %475 = vmatprep.subr.mxu0 0.0
    %v476 = vand.u32 %v31, 4294901760
    %v477 = vsub.f32 %v31, %v476
    %v478 = vand.u32 %v477, 4294901760
    %479 = vmatpush1.msra.mxu0 %v478
    %480 = vmatprep.subr.mxu0 0.0
    %v481 = vand.u32 %v30, 4294901760
    %v482 = vsub.f32 %v30, %v481
    %v483 = vand.u32 %v482, 4294901760
    %484 = vmatpush1.msra.mxu0 %v483
    %485 = vmatprep.subr.mxu0 0.0
    %v486 = vand.u32 %v29, 4294901760
    %v487 = vsub.f32 %v29, %v486
    %v488 = vand.u32 %v487, 4294901760
    %489 = vmatpush1.msra.mxu0 %v488
    %490 = vmatprep.subr.mxu0 0.0
    %v491 = vand.u32 %v28, 4294901760
    %v492 = vsub.f32 %v28, %v491
    %v493 = vand.u32 %v492, 4294901760
    %494 = vmatpush1.msra.mxu0 %v493
    %495 = vmatprep.subr.mxu0 0.0
    %v496 = vand.u32 %v27, 4294901760
    %v497 = vsub.f32 %v27, %v496
    %v498 = vand.u32 %v497, 4294901760
    %499 = vmatpush1.msra.mxu0 %v498
    %500 = vmatprep.subr.mxu0 0.0
    %v501 = vand.u32 %v26, 4294901760
    %v502 = vsub.f32 %v26, %v501
    %v503 = vand.u32 %v502, 4294901760
    %504 = vmatpush1.msra.mxu0 %v503
    %505 = vmatprep.subr.mxu0 0.0
    %v506 = vand.u32 %v25, 4294901760
    %v507 = vsub.f32 %v25, %v506
    %v508 = vand.u32 %v507, 4294901760
    %509 = vmatpush1.msra.mxu0 %v508
    %510 = vmatprep.subr.mxu0 0.0
    %v511 = vand.u32 %v24, 4294901760
    %v512 = vsub.f32 %v24, %v511
    %v513 = vand.u32 %v512, 4294901760
    %514 = vmatpush1.msra.mxu0 %v513
    %515 = vmatprep.subr.mxu0 0.0
    %v516 = vand.u32 %v23, 4294901760
    %v517 = vsub.f32 %v23, %v516
    %v518 = vand.u32 %v517, 4294901760
    %519 = vmatpush1.msra.mxu0 %v518
    %520 = vmatprep.subr.mxu0 0.0
    %v521 = vand.u32 %v22, 4294901760
    %v522 = vsub.f32 %v22, %v521
    %v523 = vand.u32 %v522, 4294901760
    %524 = vmatpush1.msra.mxu0 %v523
    %525 = vmatprep.subr.mxu0 0.0
    %v526 = vand.u32 %v21, 4294901760
    %v527 = vsub.f32 %v21, %v526
    %v528 = vand.u32 %v527, 4294901760
    %529 = vmatpush1.msra.mxu0 %v528
    %530 = vmatprep.subr.mxu0 0.0
    %v531 = vand.u32 %v20, 4294901760
    %v532 = vsub.f32 %v20, %v531
    %v533 = vand.u32 %v532, 4294901760
    %534 = vmatpush1.msra.mxu0 %v533
    %535 = vmatprep.subr.mxu0 0.0
    %v536 = vand.u32 %v19, 4294901760
    %v537 = vsub.f32 %v19, %v536
    %v538 = vand.u32 %v537, 4294901760
    %539 = vmatpush1.msra.mxu0 %v538
    %540 = vmatprep.subr.mxu0 0.0
    %v541 = vand.u32 %v18, 4294901760
    %v542 = vsub.f32 %v18, %v541
    %v543 = vand.u32 %v542, 4294901760
    %544 = vmatpush1.msra.mxu0 %v543
    %545 = vmatprep.subr.mxu0 0.0
    %v546 = vand.u32 %v17, 4294901760
    %v547 = vsub.f32 %v17, %v546
    %v548 = vand.u32 %v547, 4294901760
    %549 = vmatpush1.msra.mxu0 %v548
    %550 = vmatprep.subr.mxu0 0.0
    %551 = vmatpush2.msra.mxu0 0.0
    %552 = vmatprep.subr.mxu0 0.0
    %553 = vmatpush2.msra.mxu0 0.0
    %554 = vmatprep.subr.mxu0 0.0
    %555 = vmatpush2.msra.mxu0 0.0
    %556 = vmatprep.subr.mxu0 0.0
    %557 = vmatpush2.msra.mxu0 0.0
    %558 = vmatprep.subr.mxu0 0.0
    %559 = vmatpush2.msra.mxu0 0.0
    %560 = vmatprep.subr.mxu0 0.0
    %561 = vmatpush2.msra.mxu0 0.0
    %562 = vmatprep.subr.mxu0 0.0
    %563 = vmatpush2.msra.mxu0 0.0
    %564 = vmatprep.subr.mxu0 0.0
    %565 = vmatpush2.msra.mxu0 0.0
    %566 = vmatprep.subr.mxu0 0.0
    %567 = vmatpush2.msra.mxu0 0.0
    %568 = vmatprep.subr.mxu0 0.0
    %569 = vmatpush2.msra.mxu0 0.0
    %570 = vmatprep.subr.mxu0 0.0
    %571 = vmatpush2.msra.mxu0 0.0
    %572 = vmatprep.subr.mxu0 0.0
    %573 = vmatpush2.msra.mxu0 0.0
    %574 = vmatprep.subr.mxu0 0.0
    %575 = vmatpush2.msra.mxu0 0.0
    %576 = vmatprep.subr.mxu0 0.0
    %577 = vmatpush2.msra.mxu0 0.0
    %578 = vmatprep.subr.mxu0 0.0
    %579 = vmatpush2.msra.mxu0 0.0
    %580 = vmatprep.subr.mxu0 0.0
    %581 = vmatpush2.msra.mxu0 0.0
    %582 = vmatprep.mubr.f32.mxu0 0.0
    %v583 = vand.u32 %v16, 4294901760
    %584 = vmatmul.mubr.f32.gmra.mxu0 %v583
    %v585 = vpop.f32.mrf.mxu0
    %v586 = vadd.f32 %v467, %v585
    %v587 = vpop.f32.mrf.mxu0
    %588 = vdwg.mxu0
    %589 = vmatprep.subr.mxu0 0.0
    %v590 = vand.u32 %v32, 4294901760
    %591 = vmatpush1.msra.mxu0 %v590
    %592 = vmatprep.subr.mxu0 0.0
    %v593 = vand.u32 %v31, 4294901760
    %594 = vmatpush1.msra.mxu0 %v593
    %595 = vmatprep.subr.mxu0 0.0
    %v596 = vand.u32 %v30, 4294901760
    %597 = vmatpush1.msra.mxu0 %v596
    %598 = vmatprep.subr.mxu0 0.0
    %v599 = vand.u32 %v29, 4294901760
    %600 = vmatpush1.msra.mxu0 %v599
    %601 = vmatprep.subr.mxu0 0.0
    %v602 = vand.u32 %v28, 4294901760
    %603 = vmatpush1.msra.mxu0 %v602
    %604 = vmatprep.subr.mxu0 0.0
    %v605 = vand.u32 %v27, 4294901760
    %606 = vmatpush1.msra.mxu0 %v605
    %607 = vmatprep.subr.mxu0 0.0
    %v608 = vand.u32 %v26, 4294901760
    %609 = vmatpush1.msra.mxu0 %v608
    %610 = vmatprep.subr.mxu0 0.0
    %v611 = vand.u32 %v25, 4294901760
    %612 = vmatpush1.msra.mxu0 %v611
    %613 = vmatprep.subr.mxu0 0.0
    %v614 = vand.u32 %v24, 4294901760
    %615 = vmatpush1.msra.mxu0 %v614
    %616 = vmatprep.subr.mxu0 0.0
    %v617 = vand.u32 %v23, 4294901760
    %618 = vmatpush1.msra.mxu0 %v617
    %619 = vmatprep.subr.mxu0 0.0
    %v620 = vand.u32 %v22, 4294901760
    %621 = vmatpush1.msra.mxu0 %v620
    %622 = vmatprep.subr.mxu0 0.0
    %v623 = vand.u32 %v21, 4294901760
    %624 = vmatpush1.msra.mxu0 %v623
    %625 = vmatprep.subr.mxu0 0.0
    %v626 = vand.u32 %v20, 4294901760
    %627 = vmatpush1.msra.mxu0 %v626
    %628 = vmatprep.subr.mxu0 0.0
    %v629 = vand.u32 %v19, 4294901760
    %630 = vmatpush1.msra.mxu0 %v629
    %631 = vmatprep.subr.mxu0 0.0
    %v632 = vand.u32 %v18, 4294901760
    %633 = vmatpush1.msra.mxu0 %v632
    %634 = vmatprep.subr.mxu0 0.0
    %v635 = vand.u32 %v17, 4294901760
    %636 = vmatpush1.msra.mxu0 %v635
    %637 = vmatprep.subr.mxu0 0.0
    %638 = vmatpush2.msra.mxu0 0.0
    %639 = vmatprep.subr.mxu0 0.0
    %640 = vmatpush2.msra.mxu0 0.0
    %641 = vmatprep.subr.mxu0 0.0
    %642 = vmatpush2.msra.mxu0 0.0
    %643 = vmatprep.subr.mxu0 0.0
    %644 = vmatpush2.msra.mxu0 0.0
    %645 = vmatprep.subr.mxu0 0.0
    %646 = vmatpush2.msra.mxu0 0.0
    %647 = vmatprep.subr.mxu0 0.0
    %648 = vmatpush2.msra.mxu0 0.0
    %649 = vmatprep.subr.mxu0 0.0
    %650 = vmatpush2.msra.mxu0 0.0
    %651 = vmatprep.subr.mxu0 0.0
    %652 = vmatpush2.msra.mxu0 0.0
    %653 = vmatprep.subr.mxu0 0.0
    %654 = vmatpush2.msra.mxu0 0.0
    %655 = vmatprep.subr.mxu0 0.0
    %656 = vmatpush2.msra.mxu0 0.0
    %657 = vmatprep.subr.mxu0 0.0
    %658 = vmatpush2.msra.mxu0 0.0
    %659 = vmatprep.subr.mxu0 0.0
    %660 = vmatpush2.msra.mxu0 0.0
    %661 = vmatprep.subr.mxu0 0.0
    %662 = vmatpush2.msra.mxu0 0.0
    %663 = vmatprep.subr.mxu0 0.0
    %664 = vmatpush2.msra.mxu0 0.0
    %665 = vmatprep.subr.mxu0 0.0
    %666 = vmatpush2.msra.mxu0 0.0
    %667 = vmatprep.subr.mxu0 0.0
    %668 = vmatpush2.msra.mxu0 0.0
    %669 = vmatprep.mubr.f32.mxu0 0.0
    %v670 = vand.u32 %v16, 4294901760
    %671 = vmatmul.mubr.f32.gmra.mxu0 %v670
    %v672 = vpop.f32.mrf.mxu0
    %v673 = vadd.f32 %v586, %v672
    %v674 = vpop.f32.mrf.mxu0
    %675 = vdwg.mxu0
    %vm676 = vcmask 25600
    %677 = vst.msk [vmem:[#allocation3] sm:$0x3] %vm676, %v673
    // Predicated region
    $region14: #{tpu_custom_call.1} parent=1 // pred_check
      _
    $region15: #{tpu_custom_call.1} parent=1 // pred_check_branch
      %679 = sbr.rel (0) target = $region17
    $region16: #{tpu_custom_call.1} parent=1 // pred_region
      %s681 = ssub.s32 32, 32
      %682 = vsyncadd [#allocation4], %s681
      %s684 = sshll.u32 [#allocation3], 4
      %s685 = int_to_ptr.vmem [resolvable:$true] %s684
      %687 = dma.vmem_to_hbm [thread:$0]  %s685, 32, %s3, [#allocation4]
    $region17: #{tpu_custom_call.1} parent=1 // pred_fallthru
      _
    // Predicated region
    $region18: #{tpu_custom_call.1} parent=1 // pred_check
      _
    $region19: #{tpu_custom_call.1} parent=1 // pred_check_branch
      %689 = sbr.rel (0) target = $region21
    $region20: #{tpu_custom_call.1} parent=1 // pred_region
      %690 = dma.done [#allocation4], 32
    $region21: #{tpu_custom_call.1} parent=1 // pred_fallthru
      _
    %691 = vsyncpa [#allocation4], 1

</llo_original>
